<compile_context>
chip_gen: v7x
topology: tpu7x:2x2x1
jax: 0.10.0
libtpu: 0.0.40
codegen_flags: <defaults>
</compile_context>

<pallas_src>
import functools

import jax
import jax.numpy as jnp
from jax.experimental import pallas as pl
from jax.experimental.pallas import tpu as pltpu


def _affine_flow_kernel(z_ref, shift_ref, scale_ref, y_ref):
    """One (D, TN) tile of the flow's forward affine transform.

    z_ref    : (D, TN) f32 -- base N(0, I) samples, batch on the lane axis
    shift_ref: (D, 1)  f32 -- per-feature shift (broadcast over lanes)
    scale_ref: (D, 1)  f32 -- per-feature scale (broadcast over lanes)
    y_ref    : (D, TN) f32 -- output tile, already in the transposed layout
    """
    y_ref[...] = shift_ref[...] + scale_ref[...] * z_ref[...]


@functools.partial(jax.jit, static_argnames=("n", "tile_n"))
def sampler_wrapper(n, shift, log_scale, key, *, tile_n=128):
    """Equivalent of SamplerWrapper(flow)(n) with an affine Gaussian flow.

    n:         number of samples (static)
    shift:     [D]   per-feature shift
    log_scale: [D]   per-feature log-scale
    key:       jax PRNG key for the base-distribution draw
    returns:   [D, n]   (= flow.sample(n)[0].t())
    """
    D = shift.shape[0]
    n_tiles = pl.cdiv(n, tile_n)
    n_pad = n_tiles * tile_n  # lane-aligned padded batch; sliced off below

    # Base distribution draw, generated directly in the transposed [D, n]
    # layout (iid normals, so layout choice does not change semantics).
    z = jax.random.normal(key, (D, n_pad), dtype=jnp.float32)

    shift2 = shift.reshape(D, 1).astype(jnp.float32)
    scale2 = jnp.exp(log_scale).reshape(D, 1).astype(jnp.float32)  # hoisted exp

    out = pl.pallas_call(
        _affine_flow_kernel,
        out_shape=jax.ShapeDtypeStruct((D, n_pad), jnp.float32),
        grid=(n_tiles,),
        in_specs=[
            pl.BlockSpec((D, tile_n), lambda i: (0, i)),  # z tile
            pl.BlockSpec((D, 1), lambda i: (0, 0)),       # shift (resident)
            pl.BlockSpec((D, 1), lambda i: (0, 0)),       # scale (resident)
        ],
        out_specs=pl.BlockSpec((D, tile_n), lambda i: (0, i)),
        compiler_params=pltpu.CompilerParams(
            dimension_semantics=("parallel",),
        ),
        cost_estimate=pl.CostEstimate(
            flops=2 * D * n_pad,
            transcendentals=0,
            bytes_accessed=8 * D * n_pad + 8 * D,  # z in + y out + params
        ),
    )(z, shift2, scale2)

    return out[:, :n]  # already [D, n]; the module's .t() is free


if __name__ == "__main__":
    key = jax.random.PRNGKey(0)
    k_shift, k_scale, k_sample = jax.random.split(key, 3)

    D = 32    # feature dimension of the flow
    N = 256   # number of samples requested (forward arg `n`); 2 lane-dense tiles

    # Deterministic "flow" parameters (affine transform of a standard normal).
    shift = jax.random.normal(k_shift, (D,), dtype=jnp.float32) * 2.0
    log_scale = jax.random.uniform(
        k_scale, (D,), dtype=jnp.float32, minval=-0.7, maxval=0.7
    )

    out = sampler_wrapper(N, shift, log_scale, k_sample, tile_n=128)
    out = jax.block_until_ready(out)

    assert out.shape == (D, N), out.shape
    assert bool(jnp.all(jnp.isfinite(out)))

    # Determinism check: same key -> identical samples.
    out2 = jax.block_until_ready(
        sampler_wrapper(N, shift, log_scale, k_sample, tile_n=128)
    )
    assert bool(jnp.all(out == out2))

    # Correctness vs. a pure-JAX reference of the same flow forward pass.
    z_ref = jax.random.normal(k_sample, (D, N), dtype=jnp.float32)
    ref = shift[:, None] + jnp.exp(log_scale)[:, None] * z_ref
    assert bool(jnp.allclose(out, ref, atol=1e-6, rtol=1e-6))

    # Statistical sanity check: per-feature mean/std should track the affine
    # Gaussian flow parameters (loose bounds, 256 samples per feature).
    scale = jnp.exp(log_scale)
    mean_d = out.mean(axis=1)
    std_d = out.std(axis=1)
    assert bool(jnp.all(jnp.abs(mean_d - shift) <= 0.6 * scale)), (mean_d, shift)
    assert bool(jnp.all(jnp.abs(std_d / scale - 1.0) <= 0.5)), (std_d, scale)

    print("KERNEL_OK")
</pallas_src>

<mosaic_0001>
module attributes {stable_mosaic.version = 11 : i64} {
  func.func @_affine_flow_kernel(%arg0: i32, %arg1: memref<32x128xf32, #tpu.memory_space<vmem>>, %arg2: memref<32x1xf32, #tpu.memory_space<vmem>>, %arg3: memref<32x1xf32, #tpu.memory_space<vmem>>, %arg4: memref<32x128xf32, #tpu.memory_space<vmem>>) attributes {dimension_semantics = [#tpu.dimension_semantics<parallel>], iteration_bounds = array<i64: 2>, scalar_prefetch = 0 : i64, scratch_operands = 0 : i64, tpu.core_type = #tpu.core_type<tc>, window_params = [{transform_indices = @transform_0, window_bounds = array<i64: 32, 128>}, {pipeline_mode = #tpu.pipeline_mode<synchronous>, transform_indices = @transform_1, window_bounds = array<i64: 32, 1>}, {pipeline_mode = #tpu.pipeline_mode<synchronous>, transform_indices = @transform_2, window_bounds = array<i64: 32, 1>}, {transform_indices = @transform_3, window_bounds = array<i64: 32, 128>}]} {
    %c0 = arith.constant 0 : index
    %c0_0 = arith.constant 0 : index
    %0 = vector.load %arg2[%c0, %c0_0] : memref<32x1xf32, #tpu.memory_space<vmem>>, vector<32x1xf32>
    %c0_1 = arith.constant 0 : index
    %c0_2 = arith.constant 0 : index
    %1 = vector.load %arg3[%c0_1, %c0_2] : memref<32x1xf32, #tpu.memory_space<vmem>>, vector<32x1xf32>
    %c0_3 = arith.constant 0 : index
    %c0_4 = arith.constant 0 : index
    %2 = vector.load %arg1[%c0_3, %c0_4] : memref<32x128xf32, #tpu.memory_space<vmem>>, vector<32x128xf32>
    %3 = vector.broadcast %1 : vector<32x1xf32> to vector<32x128xf32>
    %4 = arith.mulf %3, %2 : vector<32x128xf32>
    %5 = vector.broadcast %0 : vector<32x1xf32> to vector<32x128xf32>
    %6 = arith.addf %5, %4 : vector<32x128xf32>
    %c0_5 = arith.constant 0 : index
    %c0_6 = arith.constant 0 : index
    %7 = vector.load %arg4[%c0_5, %c0_6] : memref<32x128xf32, #tpu.memory_space<vmem>>, vector<32x128xf32>
    tpu.vector_store %arg4[%c0_5, %c0_6], %6 {strides = array<i32>} : memref<32x128xf32, #tpu.memory_space<vmem>>, vector<32x128xf32>,
    return
  }
  func.func @transform_0(%arg0: i32) -> (i32, i32) {
    %c0_i32 = arith.constant 0 : i32
    %c0_i32_0 = arith.constant 0 : i32
    return %c0_i32, %arg0 : i32, i32
  }
  func.func @transform_1(%arg0: i32) -> (i32, i32) {
    %c0_i32 = arith.constant 0 : i32
    %c0_i32_0 = arith.constant 0 : i32
    %c0_i32_1 = arith.constant 0 : i32
    return %c0_i32, %c0_i32_0 : i32, i32
  }
  func.func @transform_2(%arg0: i32) -> (i32, i32) {
    %c0_i32 = arith.constant 0 : i32
    %c0_i32_0 = arith.constant 0 : i32
    %c0_i32_1 = arith.constant 0 : i32
    return %c0_i32, %c0_i32_0 : i32, i32
  }
  func.func @transform_3(%arg0: i32) -> (i32, i32) {
    %c0_i32 = arith.constant 0 : i32
    %c0_i32_0 = arith.constant 0 : i32
    return %c0_i32, %arg0 : i32, i32
  }
}

</mosaic_0001>

<llo_original>
// kernel: sampler_wrapper.1
$region0: #{sampler_wrapper.1}
  #allocation0 [shape = 'u32[]', space=smem, size = 0x4, offset = 0x4, fixed_abs, tag = 'smem constant byte address 0x4 - core index']
  #allocation1 [shape = 'u32[144,128]{1,0:T(1,128)}', space=vmem, size = 0x12000, scoped, tag = 'internal scratch']
  %s0 = inlined_call_operand.vmem [shape: f32[32,256], index: 0, kind: input, shape index: {}]
  %s1 = inlined_call_operand.vmem [shape: f32[32,1], index: 1, kind: input, shape index: {}]
  %s2 = inlined_call_operand.vmem [shape: f32[32,1], index: 2, kind: input, shape index: {}]
  %s3 = inlined_call_operand.hbm [shape: f32[32,256], index: 3, kind: output, shape index: {}]
  %s4 = sld [smem:[#allocation0]]
  $region83: #{sampler_wrapper.1} parent=0
    _
  %s6 = ssub.s32 1, %s4
  %s7 = scalar_select 0, %s6, %s4
  $region1: #{sampler_wrapper.1} parent=0
    #allocation2 [shape = 'u8[32768]{0}', space=vmem, size = 0x8000, scoped, tag = 'input window, operand 0']
    #allocation3 [shape = 'u8[32768]{0}', space=vmem, size = 0x8000, scoped, tag = 'output window, operand 0']
    #allocation4 [shape = 's32[2]{0}', space=sflag, size = 0x8, scoped, tag = 'scoped memory for sampler_wrapper.1']
    %8 = vsyncpa [#allocation4], 0
    %s9 = scalar_lea.sflag [#allocation4], 1
    %10 = vsyncpa %s9, 0
    loop: start=0, step=1, limit=4
    $region2: #{sampler_wrapper.1} parent=1 // loop_pre_header
      _
    $region3: #{sampler_wrapper.1} parent=1 // loop_header
      %s12 = sphi 0, %s16
      %p13 = scmp.ge.s32.totalorder %s12, 4
      %s22 = sphi 0, %s24
      %s25 = sphi 0, %s22
      %s26 = sphi 0, %s25
      %s42 = sphi 0, %s26
      %s46 = sphi 0, %s46
      %s48 = sphi 0, %s46
      %s49 = sphi 0, %s48
      %s63 = sphi 0, %s49
      %s67 = sphi 0, %s67
      %s69 = sphi 0, %s67
      %s70 = sphi 0, %s69
      %s84 = sphi 0, %s70
      %s90 = sphi 0, %s92
      %s93 = sphi 0, %s90
      %s94 = sphi 0, %s93
      %s110 = sphi 0, %s94
    $region4: #{sampler_wrapper.1} parent=1 // loop_header_branch
      %15 = sbr.rel (%p13) target = $region8
    $region5: #{sampler_wrapper.1} parent=1 // loop_body
      %s17 = ssub.s32 %s12, 1
      %s18 = ssub.s32 %s12, 2
      %s19 = sadd.s32 %s12, 1
      %s20 = ssub.s32 %s12, %s19
      %p21 = scmp.eq.s32.totalorder %s20, 0
      %s23 = sadd.s32 %s22, 1
      %s24 = scalar_select %p21, %s22, %s23
      %p27 = pneg %p21
      %p28 = scmp.eq.s32.totalorder %s12, 1
      %p29 = por %p27, %p28
      %p30 = scmp.ne.s32.totalorder %s22, %s25
      %p31 = scmp.eq.s32.totalorder %s12, 0
      %p32 = por %p30, %p31
      %p33 = scmp.ne.s32.totalorder %s22, %s25
      %p34 = scmp.eq.s32.totalorder %s17, 1
      %p35 = por %p33, %p34
      %p36 = scmp.ne.s32.totalorder %s25, %s26
      %p37 = scmp.eq.s32.totalorder %s17, 0
      %p38 = por %p36, %p37
      %p39 = scmp.ne.s32.totalorder %s25, %s26
      %p40 = scmp.eq.s32.totalorder %s18, 1
      %p41 = por %p39, %p40
      %p43 = scmp.ne.s32.totalorder %s26, %s42
      %p44 = scmp.eq.s32.totalorder %s18, 0
      %p45 = por %p43, %p44
      %s47 = sadd.s32 %s46, 1
      %p50 = scmp.eq.s32.totalorder %s12, 1
      %p51 = scmp.ne.s32.totalorder %s46, %s48
      %p52 = scmp.eq.s32.totalorder %s12, 0
      %p53 = por %p51, %p52
      %p54 = scmp.ne.s32.totalorder %s46, %s48
      %p55 = scmp.eq.s32.totalorder %s17, 1
      %p56 = por %p54, %p55
      %p57 = scmp.ne.s32.totalorder %s48, %s49
      %p58 = scmp.eq.s32.totalorder %s17, 0
      %p59 = por %p57, %p58
      %p60 = scmp.ne.s32.totalorder %s48, %s49
      %p61 = scmp.eq.s32.totalorder %s18, 1
      %p62 = por %p60, %p61
      %p64 = scmp.ne.s32.totalorder %s49, %s63
      %p65 = scmp.eq.s32.totalorder %s18, 0
      %p66 = por %p64, %p65
      %s68 = sadd.s32 %s67, 1
      %p71 = scmp.eq.s32.totalorder %s12, 1
      %p72 = scmp.ne.s32.totalorder %s67, %s69
      %p73 = scmp.eq.s32.totalorder %s12, 0
      %p74 = por %p72, %p73
      %p75 = scmp.ne.s32.totalorder %s67, %s69
      %p76 = scmp.eq.s32.totalorder %s17, 1
      %p77 = por %p75, %p76
      %p78 = scmp.ne.s32.totalorder %s69, %s70
      %p79 = scmp.eq.s32.totalorder %s17, 0
      %p80 = por %p78, %p79
      %p81 = scmp.ne.s32.totalorder %s69, %s70
      %p82 = scmp.eq.s32.totalorder %s18, 1
      %p83 = por %p81, %p82
      %p85 = scmp.ne.s32.totalorder %s70, %s84
      %p86 = scmp.eq.s32.totalorder %s18, 0
      %p87 = por %p85, %p86
      %s88 = ssub.s32 %s12, %s19
      %p89 = scmp.eq.s32.totalorder %s88, 0
      %s91 = sadd.s32 %s90, 1
      %s92 = scalar_select %p89, %s90, %s91
      %p95 = pneg %p89
      %p96 = scmp.eq.s32.totalorder %s12, 1
      %p97 = por %p95, %p96
      %p98 = scmp.ne.s32.totalorder %s90, %s93
      %p99 = scmp.eq.s32.totalorder %s12, 0
      %p100 = por %p98, %p99
      %p101 = scmp.ne.s32.totalorder %s90, %s93
      %p102 = scmp.eq.s32.totalorder %s17, 1
      %p103 = por %p101, %p102
      %p104 = scmp.ne.s32.totalorder %s93, %s94
      %p105 = scmp.eq.s32.totalorder %s17, 0
      %p106 = por %p104, %p105
      %p107 = scmp.ne.s32.totalorder %s93, %s94
      %p108 = scmp.eq.s32.totalorder %s18, 1
      %p109 = por %p107, %p108
      %p111 = scmp.ne.s32.totalorder %s94, %s110
      %p112 = scmp.eq.s32.totalorder %s18, 0
      %p113 = por %p111, %p112
      %p114 = scmp.le.s32.totalorder 1, %s12
      %p115 = scmp.lt.s32.totalorder %s12, 3
      %p116 = pnand %p114, %p115
      %p117 = pneg %p116
      // Predicated region
      $region9: #{sampler_wrapper.1} parent=5 // pred_check
        _
      $region10: #{sampler_wrapper.1} parent=5 // pred_check_branch
        %119 = sbr.rel (%p116) target = $region12
      $region11: #{sampler_wrapper.1} parent=5 // pred_region
        %s120 = ssub.s32 %s12, 1
        // Predicated region
        $region13: #{sampler_wrapper.1} parent=11 // pred_check
          %p121 = pneg %p59
        $region14: #{sampler_wrapper.1} parent=11 // pred_check_branch
          %123 = sbr.rel (%p121) target = $region16
        $region15: #{sampler_wrapper.1} parent=11 // pred_region
          _
        $region16: #{sampler_wrapper.1} parent=11 // pred_fallthru
          _
        // Predicated region
        $region17: #{sampler_wrapper.1} parent=11 // pred_check
          %p124 = pneg %p80
        $region18: #{sampler_wrapper.1} parent=11 // pred_check_branch
          %126 = sbr.rel (%p124) target = $region20
        $region19: #{sampler_wrapper.1} parent=11 // pred_region
          _
        $region20: #{sampler_wrapper.1} parent=11 // pred_fallthru
          _
      $region12: #{sampler_wrapper.1} parent=5 // pred_fallthru
        _
      %p127 = scmp.lt.s32.totalorder %s12, 2
      // Predicated region
      $region21: #{sampler_wrapper.1} parent=5 // pred_check
        %p128 = pneg %p127
      $region22: #{sampler_wrapper.1} parent=5 // pred_check_branch
        %130 = sbr.rel (%p128) target = $region24
      $region23: #{sampler_wrapper.1} parent=5 // pred_region
        // Predicated region
        $region25: #{sampler_wrapper.1} parent=23 // pred_check
          %p131 = pneg %p32
        $region26: #{sampler_wrapper.1} parent=23 // pred_check_branch
          %133 = sbr.rel (%p131) target = $region28
        $region27: #{sampler_wrapper.1} parent=23 // pred_region
          %s134 = sand.u32 %s22, 1
          %s135 = sand.u32 %s22, 1
          %s136 = smul.addr %s135, 32
          %s137 = scalar_lea.vmem [#allocation2], %s136
          %s138 = smul.addr %s12, 8
          %s139 = scalar_lea.vmem %s0, %s138
          // Predicated region
          $region29: #{sampler_wrapper.1} parent=27 // pred_check
            _
          $region30: #{sampler_wrapper.1} parent=27 // pred_check_branch
            %141 = sbr.rel (0) target = $region32
          $region31: #{sampler_wrapper.1} parent=27 // pred_region
            // Predicated region
            $region33: #{sampler_wrapper.1} parent=31 // pred_check
              _
            $region34: #{sampler_wrapper.1} parent=31 // pred_check_branch
              %143 = sbr.rel (0) target = $region36
            $region35: #{sampler_wrapper.1} parent=31 // pred_region
              // Predicated region
              $region48: #{sampler_wrapper.1} parent=35 // pred_check
                _
              $region49: #{sampler_wrapper.1} parent=35 // pred_check_branch
                %164 = sbr.rel (0) target = $region51
              $region50: #{sampler_wrapper.1} parent=35 // pred_region
                loop: start=0, step=1, limit=1
                $region52: #{sampler_wrapper.1} parent=50 // loop_pre_header
                  _
                $region53: #{sampler_wrapper.1} parent=50 // loop_header
                  %s166 = sphi 0, %s170
                  %p167 = scmp.ge.s32.totalorder %s166, 1
                  %s171 = sphi %s139, %s139
                  %s172 = sphi %s137, %s137
                $region54: #{sampler_wrapper.1} parent=50 // loop_header_branch
                  %169 = sbr.rel (%p167) target = $region58
                $region55: #{sampler_wrapper.1} parent=50 // loop_body
                  %v173 = vld [vmem:[%s171] sm:$0xff]
                  %174 = vst [vmem:[%s172] sm:$0xff] %v173
                  %v175 = vld [vmem:[%s171 + $0x10] sm:$0xff]
                  %176 = vst [vmem:[%s172 + $0x8] sm:$0xff] %v175
                  %v177 = vld [vmem:[%s171 + $0x20] sm:$0xff]
                  %178 = vst [vmem:[%s172 + $0x10] sm:$0xff] %v177
                  %v179 = vld [vmem:[%s171 + $0x30] sm:$0xff]
                  %180 = vst [vmem:[%s172 + $0x18] sm:$0xff] %v179
                $region56: #{sampler_wrapper.1} parent=50 // loop_footer
                  %s170 = sadd.s32 1, %s166
                $region57: #{sampler_wrapper.1} parent=50 // loop_footer_branch
                  %165 = sbr.rel target = $region53
                $region58: #{sampler_wrapper.1} parent=50 // loop_exit
                  _
              $region51: #{sampler_wrapper.1} parent=35 // pred_fallthru
                _
              // Predicated region
              $region59: #{sampler_wrapper.1} parent=35 // pred_check
                _
              $region60: #{sampler_wrapper.1} parent=35 // pred_check_branch
                %182 = sbr.rel target = $region62
              $region61: #{sampler_wrapper.1} parent=35 // pred_region
                _
              $region62: #{sampler_wrapper.1} parent=35 // pred_fallthru
                _
            $region36: #{sampler_wrapper.1} parent=31 // pred_fallthru
              _
            // Predicated region
            $region37: #{sampler_wrapper.1} parent=31 // pred_check
              _
            $region38: #{sampler_wrapper.1} parent=31 // pred_check_branch
              %145 = sbr.rel target = $region40
            $region39: #{sampler_wrapper.1} parent=31 // pred_region
              loop: start=0, step=1, limit=1
              $region41: #{sampler_wrapper.1} parent=39 // loop_pre_header
                _
              $region42: #{sampler_wrapper.1} parent=39 // loop_header
                %s148 = sphi 0, %s152
                %p149 = scmp.ge.s32.totalorder %s148, 1
                %s153 = sphi %s139, %s139
                %s154 = sphi %s137, %s137
              $region43: #{sampler_wrapper.1} parent=39 // loop_header_branch
                %151 = sbr.rel (%p149) target = $region47
              $region44: #{sampler_wrapper.1} parent=39 // loop_body
                %v155 = vld [vmem:[%s153] sm:$0xff]
                %156 = vst [vmem:[%s154] sm:$0xff] %v155
                %v157 = vld [vmem:[%s153 + $0x10] sm:$0xff]
                %158 = vst [vmem:[%s154 + $0x8] sm:$0xff] %v157
                %v159 = vld [vmem:[%s153 + $0x20] sm:$0xff]
                %160 = vst [vmem:[%s154 + $0x10] sm:$0xff] %v159
                %v161 = vld [vmem:[%s153 + $0x30] sm:$0xff]
                %162 = vst [vmem:[%s154 + $0x18] sm:$0xff] %v161
              $region45: #{sampler_wrapper.1} parent=39 // loop_footer
                %s152 = sadd.s32 1, %s148
              $region46: #{sampler_wrapper.1} parent=39 // loop_footer_branch
                %147 = sbr.rel target = $region42
              $region47: #{sampler_wrapper.1} parent=39 // loop_exit
                _
            $region40: #{sampler_wrapper.1} parent=31 // pred_fallthru
              _
          $region32: #{sampler_wrapper.1} parent=27 // pred_fallthru
            _
          %183 = vnop
        $region28: #{sampler_wrapper.1} parent=23 // pred_fallthru
          _
      $region24: #{sampler_wrapper.1} parent=5 // pred_fallthru
        _
      %p184 = scmp.le.s32.totalorder 1, %s12
      %p185 = scmp.lt.s32.totalorder %s12, 3
      %p186 = pnand %p184, %p185
      %p187 = pneg %p186
      // Predicated region
      $region63: #{sampler_wrapper.1} parent=5 // pred_check
        _
      $region64: #{sampler_wrapper.1} parent=5 // pred_check_branch
        %189 = sbr.rel (%p186) target = $region66
      $region65: #{sampler_wrapper.1} parent=5 // pred_region
        %s190 = ssub.s32 %s12, 1
        %s191 = sand.u32 %s25, 1
        %s192 = sand.u32 %s25, 1
        %s193 = smul.addr %s192, 32
        %s194 = scalar_lea.vmem [#allocation2], %s193
        // Predicated region
        $region67: #{sampler_wrapper.1} parent=65 // pred_check
          %p195 = pneg %p38
        $region68: #{sampler_wrapper.1} parent=65 // pred_check_branch
          %197 = sbr.rel (%p195) target = $region70
        $region69: #{sampler_wrapper.1} parent=65 // pred_region
          _
        $region70: #{sampler_wrapper.1} parent=65 // pred_fallthru
          _
        %s198 = sand.u32 %s25, 1
        %s199 = sand.u32 %s25, 1
        %s200 = smul.addr %s199, 32
        %s201 = scalar_lea.vmem [#allocation2], %s200
        %p202 = pneg %p38
        %p203 = pneg %p35
        %p204 = pneg %p59
        %p205 = pneg %p56
        %p206 = pneg %p80
        %p207 = pneg %p77
        %p208 = pneg %p106
        %p209 = pneg %p103
        %s210 = sand.u32 %s93, 1
        %s211 = scalar_lea.sflag [#allocation4], %s210
        %s212 = sand.u32 %s93, 1
        %s213 = smul.addr %s212, 32
        %s214 = scalar_lea.vmem [#allocation3], %s213
        %v215 = vld [vmem:[%s1] sm:$0xff]
        %v216 = vld [vmem:[%s1 + $0x8] sm:$0xff]
        %v217 = vld [vmem:[%s1 + $0x10] sm:$0xff]
        %v218 = vld [vmem:[%s1 + $0x18] sm:$0xff]
        %v219 = vld [vmem:[%s2] sm:$0xff]
        %v220 = vld [vmem:[%s2 + $0x8] sm:$0xff]
        %v221 = vld [vmem:[%s2 + $0x10] sm:$0xff]
        %v222 = vld [vmem:[%s2 + $0x18] sm:$0xff]
        %v223 = vld [vmem:[%s194] sm:$0xff]
        %v224 = vld [vmem:[%s194 + $0x8] sm:$0xff]
        %v225 = vld [vmem:[%s194 + $0x10] sm:$0xff]
        %v226 = vld [vmem:[%s194 + $0x18] sm:$0xff]
        %228 = vset.pattern.permute.xlu0 0
        %229 = vperm.xlu0 %228, %v219
        %v230 = vpop.permute.xlu0 %229
        %233 = vset.pattern.permute.xlu0 0
        %234 = vperm.xlu0 %233, %v220
        %v235 = vpop.permute.xlu0 %234
        %238 = vset.pattern.permute.xlu0 0
        %239 = vperm.xlu0 %238, %v221
        %v240 = vpop.permute.xlu0 %239
        %243 = vset.pattern.permute.xlu0 0
        %244 = vperm.xlu0 %243, %v222
        %v245 = vpop.permute.xlu0 %244
        %v247 = vmul.f32 %v230, %v223
        %v248 = vmul.f32 %v235, %v224
        %v249 = vmul.f32 %v240, %v225
        %v250 = vmul.f32 %v245, %v226
        %252 = vset.pattern.permute.xlu0 0
        %253 = vperm.xlu0 %252, %v215
        %v254 = vpop.permute.xlu0 %253
        %257 = vset.pattern.permute.xlu0 0
        %258 = vperm.xlu0 %257, %v216
        %v259 = vpop.permute.xlu0 %258
        %262 = vset.pattern.permute.xlu0 0
        %263 = vperm.xlu0 %262, %v217
        %v264 = vpop.permute.xlu0 %263
        %267 = vset.pattern.permute.xlu0 0
        %268 = vperm.xlu0 %267, %v218
        %v269 = vpop.permute.xlu0 %268
        %v271 = vadd.f32 %v254, %v247
        %v272 = vadd.f32 %v259, %v248
        %v273 = vadd.f32 %v264, %v249
        %v274 = vadd.f32 %v269, %v250
        %275 = vst [vmem:[%s214] sm:$0xff] %v271
        %276 = vst [vmem:[%s214 + $0x8] sm:$0xff] %v272
        %277 = vst [vmem:[%s214 + $0x10] sm:$0xff] %v273
        %278 = vst [vmem:[%s214 + $0x18] sm:$0xff] %v274
        %s279 = sand.u32 %s93, 1
        %s280 = scalar_lea.sflag [#allocation4], %s279
        %s281 = sand.u32 %s93, 1
        %s282 = smul.addr %s281, 32
        %s283 = scalar_lea.vmem [#allocation3], %s282
        // Predicated region
        $region71: #{sampler_wrapper.1} parent=65 // pred_check
          %p284 = pneg %p103
        $region72: #{sampler_wrapper.1} parent=65 // pred_check_branch
          %286 = sbr.rel (%p284) target = $region74
        $region73: #{sampler_wrapper.1} parent=65 // pred_region
          %s288 = ssub.s32 512, 512
          %289 = vsyncadd %s280, %s288
          %s290 = smul.addr %s17, 128
          %s291 = scalar_lea.hbm %s3, %s290
          %s292 = sshll.u32 %s283, 4
          %s293 = int_to_ptr.vmem [resolvable:$true] %s292
          %298 = dma.vmem_to_hbm [thread:$0]  %s293, 512, %s291, %s280, 128, 256, 8
        $region74: #{sampler_wrapper.1} parent=65 // pred_fallthru
          _
      $region66: #{sampler_wrapper.1} parent=5 // pred_fallthru
        _
      %p299 = scmp.le.s32.totalorder 2, %s12
      // Predicated region
      $region75: #{sampler_wrapper.1} parent=5 // pred_check
        %p300 = pneg %p299
      $region76: #{sampler_wrapper.1} parent=5 // pred_check_branch
        %302 = sbr.rel (%p300) target = $region78
      $region77: #{sampler_wrapper.1} parent=5 // pred_region
        %s303 = ssub.s32 %s12, 2
        // Predicated region
        $region79: #{sampler_wrapper.1} parent=77 // pred_check
          %p304 = pneg %p109
        $region80: #{sampler_wrapper.1} parent=77 // pred_check_branch
          %306 = sbr.rel (%p304) target = $region82
        $region81: #{sampler_wrapper.1} parent=77 // pred_region
          %s307 = sand.u32 %s94, 1
          %s308 = scalar_lea.sflag [#allocation4], %s307
          %s309 = sand.u32 %s94, 1
          %s310 = smul.addr %s309, 32
          %s311 = scalar_lea.vmem [#allocation3], %s310
          %312 = dma.done %s308, 512
        $region82: #{sampler_wrapper.1} parent=77 // pred_fallthru
          _
      $region78: #{sampler_wrapper.1} parent=5 // pred_fallthru
        _
    $region6: #{sampler_wrapper.1} parent=1 // loop_footer
      %s16 = sadd.s32 1, %s12
    $region7: #{sampler_wrapper.1} parent=1 // loop_footer_branch
      %11 = sbr.rel target = $region3
    $region8: #{sampler_wrapper.1} parent=1 // loop_exit
      _
    %313 = vsyncpa [#allocation4], 1
    %s314 = scalar_lea.sflag [#allocation4], 1
    %315 = vsyncpa %s314, 1

</llo_original>
